<compile_context>
chip_gen: v7x
topology: tpu7x:2x2x1
jax: 0.10.0
libtpu: 0.0.40
codegen_flags: <defaults>
</compile_context>

<pallas_src>
import functools

import jax
import jax.numpy as jnp
from jax.experimental import pallas as pl
from jax.experimental.pallas import tpu as pltpu

LN_EPS = 1e-5


def mapping_kernel(x_ref, w_ref, p_ref, o_ref):
    """x_ref: (TB, D); w_ref: (L, D_in, D_out); p_ref: (L, 3, D); o_ref: (TB, D)."""
    num_layers = w_ref.shape[0]

    # Activation carried as a register value across the unrolled layer loop.
    h = x_ref[...].astype(jnp.float32)                        # (TB, D)

    for l in range(num_layers):                               # static unroll (L=8)
        w = w_ref[l]                                          # (D_in, D_out), pre-transposed
        params = p_ref[l].astype(jnp.float32)                 # (3, D)
        bias = params[0:1, :]                                 # (1, D)
        gamma = params[1:2, :]                                # (1, D)
        beta = params[2:3, :]                                 # (1, D)

        # EqualLinear: y = h @ W_in_out + b  (MXU-natural contraction dims).
        y = jax.lax.dot_general(
            h, w,
            dimension_numbers=(((1,), (0,)), ((), ())),
            preferred_element_type=jnp.float32) + bias        # (TB, D_out)

        # LayerNorm over the last dim (eps=1e-5, affine), all in f32.
        mean = jnp.mean(y, axis=-1, keepdims=True)
        centered = y - mean
        var = jnp.mean(centered * centered, axis=-1, keepdims=True)
        h = centered * jax.lax.rsqrt(var + LN_EPS) * gamma + beta

    # Unconditional write of this batch tile's output.
    o_ref[...] = h.astype(o_ref.dtype)


def pack_weights(weights_torch_layout):
    """(L, D_out, D_in) PyTorch layout -> (L, D_in, D_out), done once offline."""
    return jnp.transpose(weights_torch_layout, (0, 2, 1))


def pack_affine_params(biases, gammas, betas):
    """Fuse bias / LN weight / LN bias into one (L, 3, D) array (one-time)."""
    return jnp.stack([biases, gammas, betas], axis=1)         # (L, 3, D)


@functools.partial(jax.jit, static_argnames=())
def mapping_network(x, weights_t, affine):
    """x: (B, D); weights_t: (L, D_in, D_out); affine: (L, 3, D)."""
    B, D = x.shape
    L = weights_t.shape[0]

    # Tile only the batch axis ("parallel" -> both TCs usable on v7x when B
    # grows). For the small demo shape this is a single grid step.
    tb = B if B <= 256 else 256
    assert B % tb == 0, "demo wrapper assumes B divisible by the batch tile"
    grid = (B // tb,)

    return pl.pallas_call(
        mapping_kernel,
        out_shape=jax.ShapeDtypeStruct((B, D), x.dtype),
        grid_spec=pltpu.PrefetchScalarGridSpec(
            num_scalar_prefetch=0,
            grid=grid,
            in_specs=[
                pl.BlockSpec((tb, D), lambda b: (b, 0)),        # activation tile
                pl.BlockSpec((L, D, D), lambda b: (0, 0, 0)),   # all weights, resident
                pl.BlockSpec((L, 3, D), lambda b: (0, 0, 0)),   # fused bias/gamma/beta
            ],
            out_specs=pl.BlockSpec((tb, D), lambda b: (b, 0)),
        ),
        compiler_params=pltpu.CompilerParams(
            dimension_semantics=("parallel",)),
    )(x, weights_t, affine)


def mapping_network_ref(x, weights, biases, gammas, betas):
    """Pure-JAX reference mirroring the PyTorch module exactly."""
    h = x.astype(jnp.float32)
    for l in range(weights.shape[0]):
        y = h @ weights[l].T + biases[l]
        mean = jnp.mean(y, axis=-1, keepdims=True)
        var = jnp.mean((y - mean) ** 2, axis=-1, keepdims=True)
        h = (y - mean) / jnp.sqrt(var + LN_EPS) * gammas[l] + betas[l]
    return h.astype(x.dtype)


if __name__ == "__main__":
    key = jax.random.PRNGKey(0)
    B, D, L = 8, 32, 8  # batch, latent_dim, num_layers

    k_x, k_w = jax.random.split(key)
    x = jax.random.normal(k_x, (B, D), dtype=jnp.float32)

    # Parameter init matching the PyTorch __init__:
    #   EqualLinear.weight ~ randn(out, in), EqualLinear.bias = 0
    #   LayerNorm.weight = 1, LayerNorm.bias = 0
    weights = jax.random.normal(k_w, (L, D, D), dtype=jnp.float32)  # (L, out, in)
    biases = jnp.zeros((L, D), dtype=jnp.float32)
    gammas = jnp.ones((L, D), dtype=jnp.float32)
    betas = jnp.zeros((L, D), dtype=jnp.float32)

    # One-time parameter packing (outside the per-step hot path).
    weights_t = jax.block_until_ready(pack_weights(weights))          # (L, in, out)
    affine = jax.block_until_ready(pack_affine_params(biases, gammas, betas))

    out = mapping_network(x, weights_t, affine)
    out = jax.block_until_ready(out)

    ref = mapping_network_ref(x, weights, biases, gammas, betas)
    assert jnp.allclose(out, ref, atol=1e-4, rtol=1e-4), "mismatch vs reference"

    print("KERNEL_OK")
</pallas_src>

<mosaic_0001>
module attributes {stable_mosaic.version = 11 : i64} {
  func.func @mapping_kernel(%arg0: i32, %arg1: memref<8x32xf32, #tpu.memory_space<vmem>>, %arg2: memref<8x32x32xf32, #tpu.memory_space<vmem>>, %arg3: memref<8x3x32xf32, #tpu.memory_space<vmem>>, %arg4: memref<8x32xf32, #tpu.memory_space<vmem>>) attributes {dimension_semantics = [#tpu.dimension_semantics<parallel>], iteration_bounds = array<i64: 1>, scalar_prefetch = 0 : i64, scratch_operands = 0 : i64, tpu.core_type = #tpu.core_type<tc>, window_params = [{transform_indices = @transform_0, window_bounds = array<i64: 8, 32>}, {pipeline_mode = #tpu.pipeline_mode<synchronous>, transform_indices = @transform_1, window_bounds = array<i64: 8, 32, 32>}, {pipeline_mode = #tpu.pipeline_mode<synchronous>, transform_indices = @transform_2, window_bounds = array<i64: 8, 3, 32>}, {transform_indices = @transform_3, window_bounds = array<i64: 8, 32>}]} {
    %c0 = arith.constant 0 : index
    %c0_0 = arith.constant 0 : index
    %0 = vector.load %arg1[%c0, %c0_0] : memref<8x32xf32, #tpu.memory_space<vmem>>, vector<8x32xf32>
    %c0_1 = arith.constant 0 : index
    %c0_2 = arith.constant 0 : index
    %c0_3 = arith.constant 0 : index
    %1 = vector.load %arg2[%c0_1, %c0_2, %c0_3] : memref<8x32x32xf32, #tpu.memory_space<vmem>>, vector<1x32x32xf32>
    %2 = vector.shape_cast %1 : vector<1x32x32xf32> to vector<32x32xf32>
    %c0_4 = arith.constant 0 : index
    %c0_5 = arith.constant 0 : index
    %c0_6 = arith.constant 0 : index
    %3 = vector.load %arg3[%c0_4, %c0_5, %c0_6] : memref<8x3x32xf32, #tpu.memory_space<vmem>>, vector<1x3x32xf32>
    %4 = vector.shape_cast %3 : vector<1x3x32xf32> to vector<3x32xf32>
    %5 = vector.extract_strided_slice %4 {offsets = [0, 0], sizes = [1, 32], strides = [1, 1]} : vector<3x32xf32> to vector<1x32xf32>
    %6 = vector.extract_strided_slice %4 {offsets = [1, 0], sizes = [1, 32], strides = [1, 1]} : vector<3x32xf32> to vector<1x32xf32>
    %7 = vector.extract_strided_slice %4 {offsets = [2, 0], sizes = [1, 32], strides = [1, 1]} : vector<3x32xf32> to vector<1x32xf32>
    %cst = arith.constant dense<0.000000e+00> : vector<8x32xf32>
    %8 = tpu.matmul %0, %2, %cst {dimension_numbers = #tpu.dot_dimension_numbers<[1], [0], [0], [1], [0, 0, 1, 1], [], []>} : vector<8x32xf32>, vector<32x32xf32>, vector<8x32xf32> -> vector<8x32xf32>
    %9 = vector.broadcast %5 : vector<1x32xf32> to vector<8x32xf32>
    %10 = arith.addf %8, %9 : vector<8x32xf32>
    %cst_7 = arith.constant dense<0.000000e+00> : vector<8xf32>
    %11 = vector.multi_reduction <add>, %10, %cst_7 [1] : vector<8x32xf32> to vector<8xf32>
    %12 = vector.shape_cast %11 : vector<8xf32> to vector<8x1xf32>
    %cst_8 = arith.constant 3.200000e+01 : f32
    %13 = vector.broadcast %cst_8 : f32 to vector<8x1xf32>
    %14 = arith.divf %12, %13 : vector<8x1xf32>
    %15 = vector.broadcast %14 : vector<8x1xf32> to vector<8x32xf32>
    %16 = arith.subf %10, %15 : vector<8x32xf32>
    %17 = arith.mulf %16, %16 : vector<8x32xf32>
    %cst_9 = arith.constant dense<0.000000e+00> : vector<8xf32>
    %18 = vector.multi_reduction <add>, %17, %cst_9 [1] : vector<8x32xf32> to vector<8xf32>
    %19 = vector.shape_cast %18 : vector<8xf32> to vector<8x1xf32>
    %cst_10 = arith.constant 3.200000e+01 : f32
    %20 = vector.broadcast %cst_10 : f32 to vector<8x1xf32>
    %21 = arith.divf %19, %20 : vector<8x1xf32>
    %cst_11 = arith.constant 9.99999974E-6 : f32
    %22 = vector.broadcast %cst_11 : f32 to vector<8x1xf32>
    %23 = arith.addf %21, %22 : vector<8x1xf32>
    %24 = math.rsqrt %23 : vector<8x1xf32>
    %25 = vector.broadcast %24 : vector<8x1xf32> to vector<8x32xf32>
    %26 = arith.mulf %16, %25 : vector<8x32xf32>
    %27 = vector.broadcast %6 : vector<1x32xf32> to vector<8x32xf32>
    %28 = arith.mulf %26, %27 : vector<8x32xf32>
    %29 = vector.broadcast %7 : vector<1x32xf32> to vector<8x32xf32>
    %30 = arith.addf %28, %29 : vector<8x32xf32>
    %c1 = arith.constant 1 : index
    %c0_12 = arith.constant 0 : index
    %c0_13 = arith.constant 0 : index
    %31 = vector.load %arg2[%c1, %c0_12, %c0_13] : memref<8x32x32xf32, #tpu.memory_space<vmem>>, vector<1x32x32xf32>
    %32 = vector.shape_cast %31 : vector<1x32x32xf32> to vector<32x32xf32>
    %c1_14 = arith.constant 1 : index
    %c0_15 = arith.constant 0 : index
    %c0_16 = arith.constant 0 : index
    %33 = vector.load %arg3[%c1_14, %c0_15, %c0_16] : memref<8x3x32xf32, #tpu.memory_space<vmem>>, vector<1x3x32xf32>
    %34 = vector.shape_cast %33 : vector<1x3x32xf32> to vector<3x32xf32>
    %35 = vector.extract_strided_slice %34 {offsets = [0, 0], sizes = [1, 32], strides = [1, 1]} : vector<3x32xf32> to vector<1x32xf32>
    %36 = vector.extract_strided_slice %34 {offsets = [1, 0], sizes = [1, 32], strides = [1, 1]} : vector<3x32xf32> to vector<1x32xf32>
    %37 = vector.extract_strided_slice %34 {offsets = [2, 0], sizes = [1, 32], strides = [1, 1]} : vector<3x32xf32> to vector<1x32xf32>
    %cst_17 = arith.constant dense<0.000000e+00> : vector<8x32xf32>
    %38 = tpu.matmul %30, %32, %cst_17 {dimension_numbers = #tpu.dot_dimension_numbers<[1], [0], [0], [1], [0, 0, 1, 1], [], []>} : vector<8x32xf32>, vector<32x32xf32>, vector<8x32xf32> -> vector<8x32xf32>
    %39 = vector.broadcast %35 : vector<1x32xf32> to vector<8x32xf32>
    %40 = arith.addf %38, %39 : vector<8x32xf32>
    %cst_18 = arith.constant dense<0.000000e+00> : vector<8xf32>
    %41 = vector.multi_reduction <add>, %40, %cst_18 [1] : vector<8x32xf32> to vector<8xf32>
    %42 = vector.shape_cast %41 : vector<8xf32> to vector<8x1xf32>
    %cst_19 = arith.constant 3.200000e+01 : f32
    %43 = vector.broadcast %cst_19 : f32 to vector<8x1xf32>
    %44 = arith.divf %42, %43 : vector<8x1xf32>
    %45 = vector.broadcast %44 : vector<8x1xf32> to vector<8x32xf32>
    %46 = arith.subf %40, %45 : vector<8x32xf32>
    %47 = arith.mulf %46, %46 : vector<8x32xf32>
    %cst_20 = arith.constant dense<0.000000e+00> : vector<8xf32>
    %48 = vector.multi_reduction <add>, %47, %cst_20 [1] : vector<8x32xf32> to vector<8xf32>
    %49 = vector.shape_cast %48 : vector<8xf32> to vector<8x1xf32>
    %cst_21 = arith.constant 3.200000e+01 : f32
    %50 = vector.broadcast %cst_21 : f32 to vector<8x1xf32>
    %51 = arith.divf %49, %50 : vector<8x1xf32>
    %cst_22 = arith.constant 9.99999974E-6 : f32
    %52 = vector.broadcast %cst_22 : f32 to vector<8x1xf32>
    %53 = arith.addf %51, %52 : vector<8x1xf32>
    %54 = math.rsqrt %53 : vector<8x1xf32>
    %55 = vector.broadcast %54 : vector<8x1xf32> to vector<8x32xf32>
    %56 = arith.mulf %46, %55 : vector<8x32xf32>
    %57 = vector.broadcast %36 : vector<1x32xf32> to vector<8x32xf32>
    %58 = arith.mulf %56, %57 : vector<8x32xf32>
    %59 = vector.broadcast %37 : vector<1x32xf32> to vector<8x32xf32>
    %60 = arith.addf %58, %59 : vector<8x32xf32>
    %c2 = arith.constant 2 : index
    %c0_23 = arith.constant 0 : index
    %c0_24 = arith.constant 0 : index
    %61 = vector.load %arg2[%c2, %c0_23, %c0_24] : memref<8x32x32xf32, #tpu.memory_space<vmem>>, vector<1x32x32xf32>
    %62 = vector.shape_cast %61 : vector<1x32x32xf32> to vector<32x32xf32>
    %c2_25 = arith.constant 2 : index
    %c0_26 = arith.constant 0 : index
    %c0_27 = arith.constant 0 : index
    %63 = vector.load %arg3[%c2_25, %c0_26, %c0_27] : memref<8x3x32xf32, #tpu.memory_space<vmem>>, vector<1x3x32xf32>
    %64 = vector.shape_cast %63 : vector<1x3x32xf32> to vector<3x32xf32>
    %65 = vector.extract_strided_slice %64 {offsets = [0, 0], sizes = [1, 32], strides = [1, 1]} : vector<3x32xf32> to vector<1x32xf32>
    %66 = vector.extract_strided_slice %64 {offsets = [1, 0], sizes = [1, 32], strides = [1, 1]} : vector<3x32xf32> to vector<1x32xf32>
    %67 = vector.extract_strided_slice %64 {offsets = [2, 0], sizes = [1, 32], strides = [1, 1]} : vector<3x32xf32> to vector<1x32xf32>
    %cst_28 = arith.constant dense<0.000000e+00> : vector<8x32xf32>
    %68 = tpu.matmul %60, %62, %cst_28 {dimension_numbers = #tpu.dot_dimension_numbers<[1], [0], [0], [1], [0, 0, 1, 1], [], []>} : vector<8x32xf32>, vector<32x32xf32>, vector<8x32xf32> -> vector<8x32xf32>
    %69 = vector.broadcast %65 : vector<1x32xf32> to vector<8x32xf32>
    %70 = arith.addf %68, %69 : vector<8x32xf32>
    %cst_29 = arith.constant dense<0.000000e+00> : vector<8xf32>
    %71 = vector.multi_reduction <add>, %70, %cst_29 [1] : vector<8x32xf32> to vector<8xf32>
    %72 = vector.shape_cast %71 : vector<8xf32> to vector<8x1xf32>
    %cst_30 = arith.constant 3.200000e+01 : f32
    %73 = vector.broadcast %cst_30 : f32 to vector<8x1xf32>
    %74 = arith.divf %72, %73 : vector<8x1xf32>
    %75 = vector.broadcast %74 : vector<8x1xf32> to vector<8x32xf32>
    %76 = arith.subf %70, %75 : vector<8x32xf32>
    %77 = arith.mulf %76, %76 : vector<8x32xf32>
    %cst_31 = arith.constant dense<0.000000e+00> : vector<8xf32>
    %78 = vector.multi_reduction <add>, %77, %cst_31 [1] : vector<8x32xf32> to vector<8xf32>
    %79 = vector.shape_cast %78 : vector<8xf32> to vector<8x1xf32>
    %cst_32 = arith.constant 3.200000e+01 : f32
    %80 = vector.broadcast %cst_32 : f32 to vector<8x1xf32>
    %81 = arith.divf %79, %80 : vector<8x1xf32>
    %cst_33 = arith.constant 9.99999974E-6 : f32
    %82 = vector.broadcast %cst_33 : f32 to vector<8x1xf32>
    %83 = arith.addf %81, %82 : vector<8x1xf32>
    %84 = math.rsqrt %83 : vector<8x1xf32>
    %85 = vector.broadcast %84 : vector<8x1xf32> to vector<8x32xf32>
    %86 = arith.mulf %76, %85 : vector<8x32xf32>
    %87 = vector.broadcast %66 : vector<1x32xf32> to vector<8x32xf32>
    %88 = arith.mulf %86, %87 : vector<8x32xf32>
    %89 = vector.broadcast %67 : vector<1x32xf32> to vector<8x32xf32>
    %90 = arith.addf %88, %89 : vector<8x32xf32>
    %c3 = arith.constant 3 : index
    %c0_34 = arith.constant 0 : index
    %c0_35 = arith.constant 0 : index
    %91 = vector.load %arg2[%c3, %c0_34, %c0_35] : memref<8x32x32xf32, #tpu.memory_space<vmem>>, vector<1x32x32xf32>
    %92 = vector.shape_cast %91 : vector<1x32x32xf32> to vector<32x32xf32>
    %c3_36 = arith.constant 3 : index
    %c0_37 = arith.constant 0 : index
    %c0_38 = arith.constant 0 : index
    %93 = vector.load %arg3[%c3_36, %c0_37, %c0_38] : memref<8x3x32xf32, #tpu.memory_space<vmem>>, vector<1x3x32xf32>
    %94 = vector.shape_cast %93 : vector<1x3x32xf32> to vector<3x32xf32>
    %95 = vector.extract_strided_slice %94 {offsets = [0, 0], sizes = [1, 32], strides = [1, 1]} : vector<3x32xf32> to vector<1x32xf32>
    %96 = vector.extract_strided_slice %94 {offsets = [1, 0], sizes = [1, 32], strides = [1, 1]} : vector<3x32xf32> to vector<1x32xf32>
    %97 = vector.extract_strided_slice %94 {offsets = [2, 0], sizes = [1, 32], strides = [1, 1]} : vector<3x32xf32> to vector<1x32xf32>
    %cst_39 = arith.constant dense<0.000000e+00> : vector<8x32xf32>
    %98 = tpu.matmul %90, %92, %cst_39 {dimension_numbers = #tpu.dot_dimension_numbers<[1], [0], [0], [1], [0, 0, 1, 1], [], []>} : vector<8x32xf32>, vector<32x32xf32>, vector<8x32xf32> -> vector<8x32xf32>
    %99 = vector.broadcast %95 : vector<1x32xf32> to vector<8x32xf32>
    %100 = arith.addf %98, %99 : vector<8x32xf32>
    %cst_40 = arith.constant dense<0.000000e+00> : vector<8xf32>
    %101 = vector.multi_reduction <add>, %100, %cst_40 [1] : vector<8x32xf32> to vector<8xf32>
    %102 = vector.shape_cast %101 : vector<8xf32> to vector<8x1xf32>
    %cst_41 = arith.constant 3.200000e+01 : f32
    %103 = vector.broadcast %cst_41 : f32 to vector<8x1xf32>
    %104 = arith.divf %102, %103 : vector<8x1xf32>
    %105 = vector.broadcast %104 : vector<8x1xf32> to vector<8x32xf32>
    %106 = arith.subf %100, %105 : vector<8x32xf32>
    %107 = arith.mulf %106, %106 : vector<8x32xf32>
    %cst_42 = arith.constant dense<0.000000e+00> : vector<8xf32>
    %108 = vector.multi_reduction <add>, %107, %cst_42 [1] : vector<8x32xf32> to vector<8xf32>
    %109 = vector.shape_cast %108 : vector<8xf32> to vector<8x1xf32>
    %cst_43 = arith.constant 3.200000e+01 : f32
    %110 = vector.broadcast %cst_43 : f32 to vector<8x1xf32>
    %111 = arith.divf %109, %110 : vector<8x1xf32>
    %cst_44 = arith.constant 9.99999974E-6 : f32
    %112 = vector.broadcast %cst_44 : f32 to vector<8x1xf32>
    %113 = arith.addf %111, %112 : vector<8x1xf32>
    %114 = math.rsqrt %113 : vector<8x1xf32>
    %115 = vector.broadcast %114 : vector<8x1xf32> to vector<8x32xf32>
    %116 = arith.mulf %106, %115 : vector<8x32xf32>
    %117 = vector.broadcast %96 : vector<1x32xf32> to vector<8x32xf32>
    %118 = arith.mulf %116, %117 : vector<8x32xf32>
    %119 = vector.broadcast %97 : vector<1x32xf32> to vector<8x32xf32>
    %120 = arith.addf %118, %119 : vector<8x32xf32>
    %c4 = arith.constant 4 : index
    %c0_45 = arith.constant 0 : index
    %c0_46 = arith.constant 0 : index
    %121 = vector.load %arg2[%c4, %c0_45, %c0_46] : memref<8x32x32xf32, #tpu.memory_space<vmem>>, vector<1x32x32xf32>
    %122 = vector.shape_cast %121 : vector<1x32x32xf32> to vector<32x32xf32>
    %c4_47 = arith.constant 4 : index
    %c0_48 = arith.constant 0 : index
    %c0_49 = arith.constant 0 : index
    %123 = vector.load %arg3[%c4_47, %c0_48, %c0_49] : memref<8x3x32xf32, #tpu.memory_space<vmem>>, vector<1x3x32xf32>
    %124 = vector.shape_cast %123 : vector<1x3x32xf32> to vector<3x32xf32>
    %125 = vector.extract_strided_slice %124 {offsets = [0, 0], sizes = [1, 32], strides = [1, 1]} : vector<3x32xf32> to vector<1x32xf32>
    %126 = vector.extract_strided_slice %124 {offsets = [1, 0], sizes = [1, 32], strides = [1, 1]} : vector<3x32xf32> to vector<1x32xf32>
    %127 = vector.extract_strided_slice %124 {offsets = [2, 0], sizes = [1, 32], strides = [1, 1]} : vector<3x32xf32> to vector<1x32xf32>
    %cst_50 = arith.constant dense<0.000000e+00> : vector<8x32xf32>
    %128 = tpu.matmul %120, %122, %cst_50 {dimension_numbers = #tpu.dot_dimension_numbers<[1], [0], [0], [1], [0, 0, 1, 1], [], []>} : vector<8x32xf32>, vector<32x32xf32>, vector<8x32xf32> -> vector<8x32xf32>
    %129 = vector.broadcast %125 : vector<1x32xf32> to vector<8x32xf32>
    %130 = arith.addf %128, %129 : vector<8x32xf32>
    %cst_51 = arith.constant dense<0.000000e+00> : vector<8xf32>
    %131 = vector.multi_reduction <add>, %130, %cst_51 [1] : vector<8x32xf32> to vector<8xf32>
    %132 = vector.shape_cast %131 : vector<8xf32> to vector<8x1xf32>
    %cst_52 = arith.constant 3.200000e+01 : f32
    %133 = vector.broadcast %cst_52 : f32 to vector<8x1xf32>
    %134 = arith.divf %132, %133 : vector<8x1xf32>
    %135 = vector.broadcast %134 : vector<8x1xf32> to vector<8x32xf32>
    %136 = arith.subf %130, %135 : vector<8x32xf32>
    %137 = arith.mulf %136, %136 : vector<8x32xf32>
    %cst_53 = arith.constant dense<0.000000e+00> : vector<8xf32>
    %138 = vector.multi_reduction <add>, %137, %cst_53 [1] : vector<8x32xf32> to vector<8xf32>
    %139 = vector.shape_cast %138 : vector<8xf32> to vector<8x1xf32>
    %cst_54 = arith.constant 3.200000e+01 : f32
    %140 = vector.broadcast %cst_54 : f32 to vector<8x1xf32>
    %141 = arith.divf %139, %140 : vector<8x1xf32>
    %cst_55 = arith.constant 9.99999974E-6 : f32
    %142 = vector.broadcast %cst_55 : f32 to vector<8x1xf32>
    %143 = arith.addf %141, %142 : vector<8x1xf32>
    %144 = math.rsqrt %143 : vector<8x1xf32>
    %145 = vector.broadcast %144 : vector<8x1xf32> to vector<8x32xf32>
    %146 = arith.mulf %136, %145 : vector<8x32xf32>
    %147 = vector.broadcast %126 : vector<1x32xf32> to vector<8x32xf32>
    %148 = arith.mulf %146, %147 : vector<8x32xf32>
    %149 = vector.broadcast %127 : vector<1x32xf32> to vector<8x32xf32>
    %150 = arith.addf %148, %149 : vector<8x32xf32>
    %c5 = arith.constant 5 : index
    %c0_56 = arith.constant 0 : index
    %c0_57 = arith.constant 0 : index
    %151 = vector.load %arg2[%c5, %c0_56, %c0_57] : memref<8x32x32xf32, #tpu.memory_space<vmem>>, vector<1x32x32xf32>
    %152 = vector.shape_cast %151 : vector<1x32x32xf32> to vector<32x32xf32>
    %c5_58 = arith.constant 5 : index
    %c0_59 = arith.constant 0 : index
    %c0_60 = arith.constant 0 : index
    %153 = vector.load %arg3[%c5_58, %c0_59, %c0_60] : memref<8x3x32xf32, #tpu.memory_space<vmem>>, vector<1x3x32xf32>
    %154 = vector.shape_cast %153 : vector<1x3x32xf32> to vector<3x32xf32>
    %155 = vector.extract_strided_slice %154 {offsets = [0, 0], sizes = [1, 32], strides = [1, 1]} : vector<3x32xf32> to vector<1x32xf32>
    %156 = vector.extract_strided_slice %154 {offsets = [1, 0], sizes = [1, 32], strides = [1, 1]} : vector<3x32xf32> to vector<1x32xf32>
    %157 = vector.extract_strided_slice %154 {offsets = [2, 0], sizes = [1, 32], strides = [1, 1]} : vector<3x32xf32> to vector<1x32xf32>
    %cst_61 = arith.constant dense<0.000000e+00> : vector<8x32xf32>
    %158 = tpu.matmul %150, %152, %cst_61 {dimension_numbers = #tpu.dot_dimension_numbers<[1], [0], [0], [1], [0, 0, 1, 1], [], []>} : vector<8x32xf32>, vector<32x32xf32>, vector<8x32xf32> -> vector<8x32xf32>
    %159 = vector.broadcast %155 : vector<1x32xf32> to vector<8x32xf32>
    %160 = arith.addf %158, %159 : vector<8x32xf32>
    %cst_62 = arith.constant dense<0.000000e+00> : vector<8xf32>
    %161 = vector.multi_reduction <add>, %160, %cst_62 [1] : vector<8x32xf32> to vector<8xf32>
    %162 = vector.shape_cast %161 : vector<8xf32> to vector<8x1xf32>
    %cst_63 = arith.constant 3.200000e+01 : f32
    %163 = vector.broadcast %cst_63 : f32 to vector<8x1xf32>
    %164 = arith.divf %162, %163 : vector<8x1xf32>
    %165 = vector.broadcast %164 : vector<8x1xf32> to vector<8x32xf32>
    %166 = arith.subf %160, %165 : vector<8x32xf32>
    %167 = arith.mulf %166, %166 : vector<8x32xf32>
    %cst_64 = arith.constant dense<0.000000e+00> : vector<8xf32>
    %168 = vector.multi_reduction <add>, %167, %cst_64 [1] : vector<8x32xf32> to vector<8xf32>
    %169 = vector.shape_cast %168 : vector<8xf32> to vector<8x1xf32>
    %cst_65 = arith.constant 3.200000e+01 : f32
    %170 = vector.broadcast %cst_65 : f32 to vector<8x1xf32>
    %171 = arith.divf %169, %170 : vector<8x1xf32>
    %cst_66 = arith.constant 9.99999974E-6 : f32
    %172 = vector.broadcast %cst_66 : f32 to vector<8x1xf32>
    %173 = arith.addf %171, %172 : vector<8x1xf32>
    %174 = math.rsqrt %173 : vector<8x1xf32>
    %175 = vector.broadcast %174 : vector<8x1xf32> to vector<8x32xf32>
    %176 = arith.mulf %166, %175 : vector<8x32xf32>
    %177 = vector.broadcast %156 : vector<1x32xf32> to vector<8x32xf32>
    %178 = arith.mulf %176, %177 : vector<8x32xf32>
    %179 = vector.broadcast %157 : vector<1x32xf32> to vector<8x32xf32>
    %180 = arith.addf %178, %179 : vector<8x32xf32>
    %c6 = arith.constant 6 : index
    %c0_67 = arith.constant 0 : index
    %c0_68 = arith.constant 0 : index
    %181 = vector.load %arg2[%c6, %c0_67, %c0_68] : memref<8x32x32xf32, #tpu.memory_space<vmem>>, vector<1x32x32xf32>
    %182 = vector.shape_cast %181 : vector<1x32x32xf32> to vector<32x32xf32>
    %c6_69 = arith.constant 6 : index
    %c0_70 = arith.constant 0 : index
    %c0_71 = arith.constant 0 : index
    %183 = vector.load %arg3[%c6_69, %c0_70, %c0_71] : memref<8x3x32xf32, #tpu.memory_space<vmem>>, vector<1x3x32xf32>
    %184 = vector.shape_cast %183 : vector<1x3x32xf32> to vector<3x32xf32>
    %185 = vector.extract_strided_slice %184 {offsets = [0, 0], sizes = [1, 32], strides = [1, 1]} : vector<3x32xf32> to vector<1x32xf32>
    %186 = vector.extract_strided_slice %184 {offsets = [1, 0], sizes = [1, 32], strides = [1, 1]} : vector<3x32xf32> to vector<1x32xf32>
    %187 = vector.extract_strided_slice %184 {offsets = [2, 0], sizes = [1, 32], strides = [1, 1]} : vector<3x32xf32> to vector<1x32xf32>
    %cst_72 = arith.constant dense<0.000000e+00> : vector<8x32xf32>
    %188 = tpu.matmul %180, %182, %cst_72 {dimension_numbers = #tpu.dot_dimension_numbers<[1], [0], [0], [1], [0, 0, 1, 1], [], []>} : vector<8x32xf32>, vector<32x32xf32>, vector<8x32xf32> -> vector<8x32xf32>
    %189 = vector.broadcast %185 : vector<1x32xf32> to vector<8x32xf32>
    %190 = arith.addf %188, %189 : vector<8x32xf32>
    %cst_73 = arith.constant dense<0.000000e+00> : vector<8xf32>
    %191 = vector.multi_reduction <add>, %190, %cst_73 [1] : vector<8x32xf32> to vector<8xf32>
    %192 = vector.shape_cast %191 : vector<8xf32> to vector<8x1xf32>
    %cst_74 = arith.constant 3.200000e+01 : f32
    %193 = vector.broadcast %cst_74 : f32 to vector<8x1xf32>
    %194 = arith.divf %192, %193 : vector<8x1xf32>
    %195 = vector.broadcast %194 : vector<8x1xf32> to vector<8x32xf32>
    %196 = arith.subf %190, %195 : vector<8x32xf32>
    %197 = arith.mulf %196, %196 : vector<8x32xf32>
    %cst_75 = arith.constant dense<0.000000e+00> : vector<8xf32>
    %198 = vector.multi_reduction <add>, %197, %cst_75 [1] : vector<8x32xf32> to vector<8xf32>
    %199 = vector.shape_cast %198 : vector<8xf32> to vector<8x1xf32>
    %cst_76 = arith.constant 3.200000e+01 : f32
    %200 = vector.broadcast %cst_76 : f32 to vector<8x1xf32>
    %201 = arith.divf %199, %200 : vector<8x1xf32>
    %cst_77 = arith.constant 9.99999974E-6 : f32
    %202 = vector.broadcast %cst_77 : f32 to vector<8x1xf32>
    %203 = arith.addf %201, %202 : vector<8x1xf32>
    %204 = math.rsqrt %203 : vector<8x1xf32>
    %205 = vector.broadcast %204 : vector<8x1xf32> to vector<8x32xf32>
    %206 = arith.mulf %196, %205 : vector<8x32xf32>
    %207 = vector.broadcast %186 : vector<1x32xf32> to vector<8x32xf32>
    %208 = arith.mulf %206, %207 : vector<8x32xf32>
    %209 = vector.broadcast %187 : vector<1x32xf32> to vector<8x32xf32>
    %210 = arith.addf %208, %209 : vector<8x32xf32>
    %c7 = arith.constant 7 : index
    %c0_78 = arith.constant 0 : index
    %c0_79 = arith.constant 0 : index
    %211 = vector.load %arg2[%c7, %c0_78, %c0_79] : memref<8x32x32xf32, #tpu.memory_space<vmem>>, vector<1x32x32xf32>
    %212 = vector.shape_cast %211 : vector<1x32x32xf32> to vector<32x32xf32>
    %c7_80 = arith.constant 7 : index
    %c0_81 = arith.constant 0 : index
    %c0_82 = arith.constant 0 : index
    %213 = vector.load %arg3[%c7_80, %c0_81, %c0_82] : memref<8x3x32xf32, #tpu.memory_space<vmem>>, vector<1x3x32xf32>
    %214 = vector.shape_cast %213 : vector<1x3x32xf32> to vector<3x32xf32>
    %215 = vector.extract_strided_slice %214 {offsets = [0, 0], sizes = [1, 32], strides = [1, 1]} : vector<3x32xf32> to vector<1x32xf32>
    %216 = vector.extract_strided_slice %214 {offsets = [1, 0], sizes = [1, 32], strides = [1, 1]} : vector<3x32xf32> to vector<1x32xf32>
    %217 = vector.extract_strided_slice %214 {offsets = [2, 0], sizes = [1, 32], strides = [1, 1]} : vector<3x32xf32> to vector<1x32xf32>
    %cst_83 = arith.constant dense<0.000000e+00> : vector<8x32xf32>
    %218 = tpu.matmul %210, %212, %cst_83 {dimension_numbers = #tpu.dot_dimension_numbers<[1], [0], [0], [1], [0, 0, 1, 1], [], []>} : vector<8x32xf32>, vector<32x32xf32>, vector<8x32xf32> -> vector<8x32xf32>
    %219 = vector.broadcast %215 : vector<1x32xf32> to vector<8x32xf32>
    %220 = arith.addf %218, %219 : vector<8x32xf32>
    %cst_84 = arith.constant dense<0.000000e+00> : vector<8xf32>
    %221 = vector.multi_reduction <add>, %220, %cst_84 [1] : vector<8x32xf32> to vector<8xf32>
    %222 = vector.shape_cast %221 : vector<8xf32> to vector<8x1xf32>
    %cst_85 = arith.constant 3.200000e+01 : f32
    %223 = vector.broadcast %cst_85 : f32 to vector<8x1xf32>
    %224 = arith.divf %222, %223 : vector<8x1xf32>
    %225 = vector.broadcast %224 : vector<8x1xf32> to vector<8x32xf32>
    %226 = arith.subf %220, %225 : vector<8x32xf32>
    %227 = arith.mulf %226, %226 : vector<8x32xf32>
    %cst_86 = arith.constant dense<0.000000e+00> : vector<8xf32>
    %228 = vector.multi_reduction <add>, %227, %cst_86 [1] : vector<8x32xf32> to vector<8xf32>
    %229 = vector.shape_cast %228 : vector<8xf32> to vector<8x1xf32>
    %cst_87 = arith.constant 3.200000e+01 : f32
    %230 = vector.broadcast %cst_87 : f32 to vector<8x1xf32>
    %231 = arith.divf %229, %230 : vector<8x1xf32>
    %cst_88 = arith.constant 9.99999974E-6 : f32
    %232 = vector.broadcast %cst_88 : f32 to vector<8x1xf32>
    %233 = arith.addf %231, %232 : vector<8x1xf32>
    %234 = math.rsqrt %233 : vector<8x1xf32>
    %235 = vector.broadcast %234 : vector<8x1xf32> to vector<8x32xf32>
    %236 = arith.mulf %226, %235 : vector<8x32xf32>
    %237 = vector.broadcast %216 : vector<1x32xf32> to vector<8x32xf32>
    %238 = arith.mulf %236, %237 : vector<8x32xf32>
    %239 = vector.broadcast %217 : vector<1x32xf32> to vector<8x32xf32>
    %240 = arith.addf %238, %239 : vector<8x32xf32>
    %c0_89 = arith.constant 0 : index
    %c0_90 = arith.constant 0 : index
    %241 = vector.load %arg4[%c0_89, %c0_90] : memref<8x32xf32, #tpu.memory_space<vmem>>, vector<8x32xf32>
    tpu.vector_store %arg4[%c0_89, %c0_90], %240 {strides = array<i32>} : memref<8x32xf32, #tpu.memory_space<vmem>>, vector<8x32xf32>,
    return
  }
  func.func @transform_0(%arg0: i32) -> (i32, i32) {
    %c0_i32 = arith.constant 0 : i32
    %c0_i32_0 = arith.constant 0 : i32
    return %arg0, %c0_i32 : i32, i32
  }
  func.func @transform_1(%arg0: i32) -> (i32, i32, i32) {
    %c0_i32 = arith.constant 0 : i32
    %c0_i32_0 = arith.constant 0 : i32
    %c0_i32_1 = arith.constant 0 : i32
    %c0_i32_2 = arith.constant 0 : i32
    return %c0_i32, %c0_i32_0, %c0_i32_1 : i32, i32, i32
  }
  func.func @transform_2(%arg0: i32) -> (i32, i32, i32) {
    %c0_i32 = arith.constant 0 : i32
    %c0_i32_0 = arith.constant 0 : i32
    %c0_i32_1 = arith.constant 0 : i32
    %c0_i32_2 = arith.constant 0 : i32
    return %c0_i32, %c0_i32_0, %c0_i32_1 : i32, i32, i32
  }
  func.func @transform_3(%arg0: i32) -> (i32, i32) {
    %c0_i32 = arith.constant 0 : i32
    %c0_i32_0 = arith.constant 0 : i32
    return %arg0, %c0_i32 : i32, i32
  }
}

</mosaic_0001>

<llo_original>
// kernel: mapping_network.1
$region0: #{mapping_network.1}
  #allocation0 [shape = 'u32[]', space=smem, size = 0x4, offset = 0x4, fixed_abs, tag = 'smem constant byte address 0x4 - core index']
  #allocation1 [shape = 'u32[144,128]{1,0:T(1,128)}', space=vmem, size = 0x12000, scoped, tag = 'internal scratch']
  %s0 = inlined_call_operand.vmem [shape: f32[8,32], index: 0, kind: input, shape index: {}]
  %s1 = inlined_call_operand.hbm [shape: f32[8,32,32], index: 1, kind: input, shape index: {}]
  %s2 = inlined_call_operand.vmem [shape: f32[8,3,32], index: 2, kind: input, shape index: {}]
  %s3 = inlined_call_operand.hbm [shape: f32[8,32], index: 3, kind: output, shape index: {}]
  %s4 = sld [smem:[#allocation0]]
  $region26: #{mapping_network.1} parent=0
    _
  %s6 = ssub.s32 1, %s4
  %s7 = scalar_select 0, %s6, %s4
  $region1: #{mapping_network.1} parent=0
    #allocation2 [shape = 'u8[131072]{0}', space=vmem, size = 0x20000, scoped, tag = 'input window, operand 1, single buffered']
    #allocation3 [shape = 's32[1]{0}', space=sflag, size = 0x4, scoped, tag = 'scoped memory for mapping_network.1']
    #allocation4 [shape = 's32[1]{0}', space=sflag, size = 0x4, scoped, tag = 'scoped memory for mapping_network.1']
    #allocation5 [shape = 'u8[4096]{0}', space=vmem, size = 0x1000, scoped, tag = 'output window, operand 0, single buffered']
    %8 = vsyncpa [#allocation3], 0
    %9 = vsyncpa [#allocation4], 0
    // Predicated region
    $region2: #{mapping_network.1} parent=1 // pred_check
      _
    $region3: #{mapping_network.1} parent=1 // pred_check_branch
      %11 = sbr.rel (0) target = $region5
    $region4: #{mapping_network.1} parent=1 // pred_region
      _
    $region5: #{mapping_network.1} parent=1 // pred_fallthru
      _
    // Predicated region
    $region6: #{mapping_network.1} parent=1 // pred_check
      _
    $region7: #{mapping_network.1} parent=1 // pred_check_branch
      %13 = sbr.rel (0) target = $region9
    $region8: #{mapping_network.1} parent=1 // pred_region
      %s15 = ssub.s32 4096, 4096
      %16 = vsyncadd [#allocation3], %s15
      %s17 = sshll.u32 [#allocation2], 4
      %s18 = int_to_ptr.vmem [resolvable:$true] %s17
      %23 = dma.hbm_to_vmem [thread:$0]  %s1, 4096, %s18, [#allocation3], 128, 128, 8
    $region9: #{mapping_network.1} parent=1 // pred_fallthru
      _
    // Predicated region
    $region10: #{mapping_network.1} parent=1 // pred_check
      _
    $region11: #{mapping_network.1} parent=1 // pred_check_branch
      %25 = sbr.rel (0) target = $region13
    $region12: #{mapping_network.1} parent=1 // pred_region
      _
    $region13: #{mapping_network.1} parent=1 // pred_fallthru
      _
    // Predicated region
    $region14: #{mapping_network.1} parent=1 // pred_check
      _
    $region15: #{mapping_network.1} parent=1 // pred_check_branch
      %27 = sbr.rel (0) target = $region17
    $region16: #{mapping_network.1} parent=1 // pred_region
      %28 = dma.done [#allocation3], 4096
    $region17: #{mapping_network.1} parent=1 // pred_fallthru
      _
    %v29 = vld [vmem:[%s0] sm:$0xff]
    %v30 = vld [vmem:[#allocation2] sm:$0xff]
    %v31 = vld [vmem:[#allocation2 + $0x8] sm:$0xff]
    %v32 = vld [vmem:[#allocation2 + $0x10] sm:$0xff]
    %v33 = vld [vmem:[#allocation2 + $0x18] sm:$0xff]
    %v34 = vld [vmem:[%s2] sm:$0x7]
    %v35 = vlaneseq
    %v36 = vshrl.u32 %v35, 7
    %v37 = vsub.s32 0, %v36
    %v38 = vrot.slane %v34, %v37
    %vm39 = vcmask 261120
    %v41 = vsel %vm39, %v29, 0
    %43 = vmatprep.subr.mxu0 0.0
    %44 = vmatpush1.msra.mxu0 %v30
    %45 = vmatprep.subr.mxu0 0.0
    %46 = vmatpush1.msra.mxu0 %v31
    %47 = vmatprep.subr.mxu0 0.0
    %48 = vmatpush1.msra.mxu0 %v32
    %49 = vmatprep.subr.mxu0 0.0
    %50 = vmatpush1.msra.mxu0 %v33
    %51 = vmatprep.subr.mxu0 0.0
    %52 = vmatpush1.msra.mxu0 0.0
    %53 = vmatprep.subr.mxu0 0.0
    %54 = vmatpush1.msra.mxu0 0.0
    %55 = vmatprep.subr.mxu0 0.0
    %56 = vmatpush1.msra.mxu0 0.0
    %57 = vmatprep.subr.mxu0 0.0
    %58 = vmatpush1.msra.mxu0 0.0
    %59 = vmatprep.subr.mxu0 0.0
    %60 = vmatpush1.msra.mxu0 0.0
    %61 = vmatprep.subr.mxu0 0.0
    %62 = vmatpush1.msra.mxu0 0.0
    %63 = vmatprep.subr.mxu0 0.0
    %64 = vmatpush1.msra.mxu0 0.0
    %65 = vmatprep.subr.mxu0 0.0
    %66 = vmatpush1.msra.mxu0 0.0
    %67 = vmatprep.subr.mxu0 0.0
    %68 = vmatpush1.msra.mxu0 0.0
    %69 = vmatprep.subr.mxu0 0.0
    %70 = vmatpush1.msra.mxu0 0.0
    %71 = vmatprep.subr.mxu0 0.0
    %72 = vmatpush1.msra.mxu0 0.0
    %73 = vmatprep.subr.mxu0 0.0
    %74 = vmatpush1.msra.mxu0 0.0
    %75 = vmatprep.subr.mxu0 0.0
    %76 = vmatpush1.msra.mxu0 0.0
    %77 = vmatprep.subr.mxu0 0.0
    %78 = vmatpush1.msra.mxu0 0.0
    %79 = vmatprep.subr.mxu0 0.0
    %80 = vmatpush1.msra.mxu0 0.0
    %81 = vmatprep.subr.mxu0 0.0
    %82 = vmatpush1.msra.mxu0 0.0
    %83 = vmatprep.subr.mxu0 0.0
    %84 = vmatpush1.msra.mxu0 0.0
    %85 = vmatprep.subr.mxu0 0.0
    %86 = vmatpush1.msra.mxu0 0.0
    %87 = vmatprep.subr.mxu0 0.0
    %88 = vmatpush1.msra.mxu0 0.0
    %89 = vmatprep.subr.mxu0 0.0
    %90 = vmatpush1.msra.mxu0 0.0
    %91 = vmatprep.subr.mxu0 0.0
    %92 = vmatpush1.msra.mxu0 0.0
    %93 = vmatprep.subr.mxu0 0.0
    %94 = vmatpush1.msra.mxu0 0.0
    %95 = vmatprep.subr.mxu0 0.0
    %96 = vmatpush1.msra.mxu0 0.0
    %97 = vmatprep.subr.mxu0 0.0
    %98 = vmatpush1.msra.mxu0 0.0
    %99 = vmatprep.subr.mxu0 0.0
    %100 = vmatpush1.msra.mxu0 0.0
    %101 = vmatprep.subr.mxu0 0.0
    %102 = vmatpush1.msra.mxu0 0.0
    %103 = vmatprep.subr.mxu0 0.0
    %104 = vmatpush1.msra.mxu0 0.0
    %105 = vmatprep.subr.mxu0 0.0
    %106 = vmatpush1.msra.mxu0 0.0
    %107 = vmatprep.mubr.f32.mxu0 0.0
    %108 = vmatmul.mubr.f32.gmra.mrb[0].mxu0 %v41
    %v109 = vpop.f32.mrb[0].mxu0
    %v110 = vadd.f32 %v38, %v109
    %v111 = vpop.f32.mrb[0].mxu0
    %112 = vdwg.mxu0
    %v113 = vsel %vm39, %v110, 0.0
    %114 = vadd.xlane.f32.xlu0 %v113
    %v115 = vpop.xlane.xlu0 %114
    %v116 = vrcp.pop 32.0
    %v117 = vmul.f32 %v115, %v116
    %v118 = vsub.f32 %v110, %v117
    %v119 = vmul.f32 %v118, %v118
    %v120 = vsel %vm39, %v119, 0.0
    %121 = vadd.xlane.f32.xlu0 %v120
    %v122 = vpop.xlane.xlu0 %121
    %v123 = vmul.f32 %v122, %v116
    %v124 = vadd.f32 %v123, 1e-05
    %v125 = vrsqrt.pop %v124
    %v126 = vmul.f32 %v118, %v125
    %v127 = vlaneseq
    %v128 = vshrl.u32 %v127, 7
    %v129 = vsub.s32 1, %v128
    %v130 = vrot.slane %v34, %v129
    %v131 = vmul.f32 %v126, %v130
    %v132 = vlaneseq
    %v133 = vshrl.u32 %v132, 7
    %v134 = vsub.s32 2, %v133
    %v135 = vrot.slane %v34, %v134
    %v136 = vadd.f32 %v131, %v135
    %s137 = scalar_lea.vmem [#allocation2], 32
    %v138 = vld [vmem:[%s137] sm:$0xff]
    %v139 = vld [vmem:[%s137 + $0x8] sm:$0xff]
    %v140 = vld [vmem:[%s137 + $0x10] sm:$0xff]
    %v141 = vld [vmem:[%s137 + $0x18] sm:$0xff]
    %s142 = scalar_lea.vmem %s2, 4
    %v143 = vld [vmem:[%s142] sm:$0x7]
    %v144 = vlaneseq
    %v145 = vshrl.u32 %v144, 7
    %v146 = vsub.s32 0, %v145
    %v147 = vrot.slane %v143, %v146
    %v149 = vsel %vm39, %v136, 0
    %151 = vmatprep.subr.mxu0 0.0
    %152 = vmatpush1.msra.mxu0 %v138
    %153 = vmatprep.subr.mxu0 0.0
    %154 = vmatpush1.msra.mxu0 %v139
    %155 = vmatprep.subr.mxu0 0.0
    %156 = vmatpush1.msra.mxu0 %v140
    %157 = vmatprep.subr.mxu0 0.0
    %158 = vmatpush1.msra.mxu0 %v141
    %159 = vmatprep.subr.mxu0 0.0
    %160 = vmatpush1.msra.mxu0 0.0
    %161 = vmatprep.subr.mxu0 0.0
    %162 = vmatpush1.msra.mxu0 0.0
    %163 = vmatprep.subr.mxu0 0.0
    %164 = vmatpush1.msra.mxu0 0.0
    %165 = vmatprep.subr.mxu0 0.0
    %166 = vmatpush1.msra.mxu0 0.0
    %167 = vmatprep.subr.mxu0 0.0
    %168 = vmatpush1.msra.mxu0 0.0
    %169 = vmatprep.subr.mxu0 0.0
    %170 = vmatpush1.msra.mxu0 0.0
    %171 = vmatprep.subr.mxu0 0.0
    %172 = vmatpush1.msra.mxu0 0.0
    %173 = vmatprep.subr.mxu0 0.0
    %174 = vmatpush1.msra.mxu0 0.0
    %175 = vmatprep.subr.mxu0 0.0
    %176 = vmatpush1.msra.mxu0 0.0
    %177 = vmatprep.subr.mxu0 0.0
    %178 = vmatpush1.msra.mxu0 0.0
    %179 = vmatprep.subr.mxu0 0.0
    %180 = vmatpush1.msra.mxu0 0.0
    %181 = vmatprep.subr.mxu0 0.0
    %182 = vmatpush1.msra.mxu0 0.0
    %183 = vmatprep.subr.mxu0 0.0
    %184 = vmatpush1.msra.mxu0 0.0
    %185 = vmatprep.subr.mxu0 0.0
    %186 = vmatpush1.msra.mxu0 0.0
    %187 = vmatprep.subr.mxu0 0.0
    %188 = vmatpush1.msra.mxu0 0.0
    %189 = vmatprep.subr.mxu0 0.0
    %190 = vmatpush1.msra.mxu0 0.0
    %191 = vmatprep.subr.mxu0 0.0
    %192 = vmatpush1.msra.mxu0 0.0
    %193 = vmatprep.subr.mxu0 0.0
    %194 = vmatpush1.msra.mxu0 0.0
    %195 = vmatprep.subr.mxu0 0.0
    %196 = vmatpush1.msra.mxu0 0.0
    %197 = vmatprep.subr.mxu0 0.0
    %198 = vmatpush1.msra.mxu0 0.0
    %199 = vmatprep.subr.mxu0 0.0
    %200 = vmatpush1.msra.mxu0 0.0
    %201 = vmatprep.subr.mxu0 0.0
    %202 = vmatpush1.msra.mxu0 0.0
    %203 = vmatprep.subr.mxu0 0.0
    %204 = vmatpush1.msra.mxu0 0.0
    %205 = vmatprep.subr.mxu0 0.0
    %206 = vmatpush1.msra.mxu0 0.0
    %207 = vmatprep.subr.mxu0 0.0
    %208 = vmatpush1.msra.mxu0 0.0
    %209 = vmatprep.subr.mxu0 0.0
    %210 = vmatpush1.msra.mxu0 0.0
    %211 = vmatprep.subr.mxu0 0.0
    %212 = vmatpush1.msra.mxu0 0.0
    %213 = vmatprep.subr.mxu0 0.0
    %214 = vmatpush1.msra.mxu0 0.0
    %215 = vmatprep.mubr.f32.mxu0 0.0
    %216 = vmatmul.mubr.f32.gmra.mrb[0].mxu0 %v149
    %v217 = vpop.f32.mrb[0].mxu0
    %v218 = vadd.f32 %v147, %v217
    %v219 = vpop.f32.mrb[0].mxu0
    %220 = vdwg.mxu0
    %v221 = vsel %vm39, %v218, 0.0
    %222 = vadd.xlane.f32.xlu0 %v221
    %v223 = vpop.xlane.xlu0 %222
    %v224 = vmul.f32 %v223, %v116
    %v225 = vsub.f32 %v218, %v224
    %v226 = vmul.f32 %v225, %v225
    %v227 = vsel %vm39, %v226, 0.0
    %228 = vadd.xlane.f32.xlu0 %v227
    %v229 = vpop.xlane.xlu0 %228
    %v230 = vmul.f32 %v229, %v116
    %v231 = vadd.f32 %v230, 1e-05
    %v232 = vrsqrt.pop %v231
    %v233 = vmul.f32 %v225, %v232
    %v234 = vlaneseq
    %v235 = vshrl.u32 %v234, 7
    %v236 = vsub.s32 1, %v235
    %v237 = vrot.slane %v143, %v236
    %v238 = vmul.f32 %v233, %v237
    %v239 = vlaneseq
    %v240 = vshrl.u32 %v239, 7
    %v241 = vsub.s32 2, %v240
    %v242 = vrot.slane %v143, %v241
    %v243 = vadd.f32 %v238, %v242
    %s244 = scalar_lea.vmem [#allocation2], 64
    %v245 = vld [vmem:[%s244] sm:$0xff]
    %v246 = vld [vmem:[%s244 + $0x8] sm:$0xff]
    %v247 = vld [vmem:[%s244 + $0x10] sm:$0xff]
    %v248 = vld [vmem:[%s244 + $0x18] sm:$0xff]
    %s249 = scalar_lea.vmem %s2, 8
    %v250 = vld [vmem:[%s249] sm:$0x7]
    %v251 = vlaneseq
    %v252 = vshrl.u32 %v251, 7
    %v253 = vsub.s32 0, %v252
    %v254 = vrot.slane %v250, %v253
    %v256 = vsel %vm39, %v243, 0
    %258 = vmatprep.subr.mxu0 0.0
    %259 = vmatpush1.msra.mxu0 %v245
    %260 = vmatprep.subr.mxu0 0.0
    %261 = vmatpush1.msra.mxu0 %v246
    %262 = vmatprep.subr.mxu0 0.0
    %263 = vmatpush1.msra.mxu0 %v247
    %264 = vmatprep.subr.mxu0 0.0
    %265 = vmatpush1.msra.mxu0 %v248
    %266 = vmatprep.subr.mxu0 0.0
    %267 = vmatpush1.msra.mxu0 0.0
    %268 = vmatprep.subr.mxu0 0.0
    %269 = vmatpush1.msra.mxu0 0.0
    %270 = vmatprep.subr.mxu0 0.0
    %271 = vmatpush1.msra.mxu0 0.0
    %272 = vmatprep.subr.mxu0 0.0
    %273 = vmatpush1.msra.mxu0 0.0
    %274 = vmatprep.subr.mxu0 0.0
    %275 = vmatpush1.msra.mxu0 0.0
    %276 = vmatprep.subr.mxu0 0.0
    %277 = vmatpush1.msra.mxu0 0.0
    %278 = vmatprep.subr.mxu0 0.0
    %279 = vmatpush1.msra.mxu0 0.0
    %280 = vmatprep.subr.mxu0 0.0
    %281 = vmatpush1.msra.mxu0 0.0
    %282 = vmatprep.subr.mxu0 0.0
    %283 = vmatpush1.msra.mxu0 0.0
    %284 = vmatprep.subr.mxu0 0.0
    %285 = vmatpush1.msra.mxu0 0.0
    %286 = vmatprep.subr.mxu0 0.0
    %287 = vmatpush1.msra.mxu0 0.0
    %288 = vmatprep.subr.mxu0 0.0
    %289 = vmatpush1.msra.mxu0 0.0
    %290 = vmatprep.subr.mxu0 0.0
    %291 = vmatpush1.msra.mxu0 0.0
    %292 = vmatprep.subr.mxu0 0.0
    %293 = vmatpush1.msra.mxu0 0.0
    %294 = vmatprep.subr.mxu0 0.0
    %295 = vmatpush1.msra.mxu0 0.0
    %296 = vmatprep.subr.mxu0 0.0
    %297 = vmatpush1.msra.mxu0 0.0
    %298 = vmatprep.subr.mxu0 0.0
    %299 = vmatpush1.msra.mxu0 0.0
    %300 = vmatprep.subr.mxu0 0.0
    %301 = vmatpush1.msra.mxu0 0.0
    %302 = vmatprep.subr.mxu0 0.0
    %303 = vmatpush1.msra.mxu0 0.0
    %304 = vmatprep.subr.mxu0 0.0
    %305 = vmatpush1.msra.mxu0 0.0
    %306 = vmatprep.subr.mxu0 0.0
    %307 = vmatpush1.msra.mxu0 0.0
    %308 = vmatprep.subr.mxu0 0.0
    %309 = vmatpush1.msra.mxu0 0.0
    %310 = vmatprep.subr.mxu0 0.0
    %311 = vmatpush1.msra.mxu0 0.0
    %312 = vmatprep.subr.mxu0 0.0
    %313 = vmatpush1.msra.mxu0 0.0
    %314 = vmatprep.subr.mxu0 0.0
    %315 = vmatpush1.msra.mxu0 0.0
    %316 = vmatprep.subr.mxu0 0.0
    %317 = vmatpush1.msra.mxu0 0.0
    %318 = vmatprep.subr.mxu0 0.0
    %319 = vmatpush1.msra.mxu0 0.0
    %320 = vmatprep.subr.mxu0 0.0
    %321 = vmatpush1.msra.mxu0 0.0
    %322 = vmatprep.mubr.f32.mxu0 0.0
    %323 = vmatmul.mubr.f32.gmra.mrb[0].mxu0 %v256
    %v324 = vpop.f32.mrb[0].mxu0
    %v325 = vadd.f32 %v254, %v324
    %v326 = vpop.f32.mrb[0].mxu0
    %327 = vdwg.mxu0
    %v328 = vsel %vm39, %v325, 0.0
    %329 = vadd.xlane.f32.xlu0 %v328
    %v330 = vpop.xlane.xlu0 %329
    %v331 = vmul.f32 %v330, %v116
    %v332 = vsub.f32 %v325, %v331
    %v333 = vmul.f32 %v332, %v332
    %v334 = vsel %vm39, %v333, 0.0
    %335 = vadd.xlane.f32.xlu0 %v334
    %v336 = vpop.xlane.xlu0 %335
    %v337 = vmul.f32 %v336, %v116
    %v338 = vadd.f32 %v337, 1e-05
    %v339 = vrsqrt.pop %v338
    %v340 = vmul.f32 %v332, %v339
    %v341 = vlaneseq
    %v342 = vshrl.u32 %v341, 7
    %v343 = vsub.s32 1, %v342
    %v344 = vrot.slane %v250, %v343
    %v345 = vmul.f32 %v340, %v344
    %v346 = vlaneseq
    %v347 = vshrl.u32 %v346, 7
    %v348 = vsub.s32 2, %v347
    %v349 = vrot.slane %v250, %v348
    %v350 = vadd.f32 %v345, %v349
    %s351 = scalar_lea.vmem [#allocation2], 96
    %v352 = vld [vmem:[%s351] sm:$0xff]
    %v353 = vld [vmem:[%s351 + $0x8] sm:$0xff]
    %v354 = vld [vmem:[%s351 + $0x10] sm:$0xff]
    %v355 = vld [vmem:[%s351 + $0x18] sm:$0xff]
    %s356 = scalar_lea.vmem %s2, 12
    %v357 = vld [vmem:[%s356] sm:$0x7]
    %v358 = vlaneseq
    %v359 = vshrl.u32 %v358, 7
    %v360 = vsub.s32 0, %v359
    %v361 = vrot.slane %v357, %v360
    %v363 = vsel %vm39, %v350, 0
    %365 = vmatprep.subr.mxu0 0.0
    %366 = vmatpush1.msra.mxu0 %v352
    %367 = vmatprep.subr.mxu0 0.0
    %368 = vmatpush1.msra.mxu0 %v353
    %369 = vmatprep.subr.mxu0 0.0
    %370 = vmatpush1.msra.mxu0 %v354
    %371 = vmatprep.subr.mxu0 0.0
    %372 = vmatpush1.msra.mxu0 %v355
    %373 = vmatprep.subr.mxu0 0.0
    %374 = vmatpush1.msra.mxu0 0.0
    %375 = vmatprep.subr.mxu0 0.0
    %376 = vmatpush1.msra.mxu0 0.0
    %377 = vmatprep.subr.mxu0 0.0
    %378 = vmatpush1.msra.mxu0 0.0
    %379 = vmatprep.subr.mxu0 0.0
    %380 = vmatpush1.msra.mxu0 0.0
    %381 = vmatprep.subr.mxu0 0.0
    %382 = vmatpush1.msra.mxu0 0.0
    %383 = vmatprep.subr.mxu0 0.0
    %384 = vmatpush1.msra.mxu0 0.0
    %385 = vmatprep.subr.mxu0 0.0
    %386 = vmatpush1.msra.mxu0 0.0
    %387 = vmatprep.subr.mxu0 0.0
    %388 = vmatpush1.msra.mxu0 0.0
    %389 = vmatprep.subr.mxu0 0.0
    %390 = vmatpush1.msra.mxu0 0.0
    %391 = vmatprep.subr.mxu0 0.0
    %392 = vmatpush1.msra.mxu0 0.0
    %393 = vmatprep.subr.mxu0 0.0
    %394 = vmatpush1.msra.mxu0 0.0
    %395 = vmatprep.subr.mxu0 0.0
    %396 = vmatpush1.msra.mxu0 0.0
    %397 = vmatprep.subr.mxu0 0.0
    %398 = vmatpush1.msra.mxu0 0.0
    %399 = vmatprep.subr.mxu0 0.0
    %400 = vmatpush1.msra.mxu0 0.0
    %401 = vmatprep.subr.mxu0 0.0
    %402 = vmatpush1.msra.mxu0 0.0
    %403 = vmatprep.subr.mxu0 0.0
    %404 = vmatpush1.msra.mxu0 0.0
    %405 = vmatprep.subr.mxu0 0.0
    %406 = vmatpush1.msra.mxu0 0.0
    %407 = vmatprep.subr.mxu0 0.0
    %408 = vmatpush1.msra.mxu0 0.0
    %409 = vmatprep.subr.mxu0 0.0
    %410 = vmatpush1.msra.mxu0 0.0
    %411 = vmatprep.subr.mxu0 0.0
    %412 = vmatpush1.msra.mxu0 0.0
    %413 = vmatprep.subr.mxu0 0.0
    %414 = vmatpush1.msra.mxu0 0.0
    %415 = vmatprep.subr.mxu0 0.0
    %416 = vmatpush1.msra.mxu0 0.0
    %417 = vmatprep.subr.mxu0 0.0
    %418 = vmatpush1.msra.mxu0 0.0
    %419 = vmatprep.subr.mxu0 0.0
    %420 = vmatpush1.msra.mxu0 0.0
    %421 = vmatprep.subr.mxu0 0.0
    %422 = vmatpush1.msra.mxu0 0.0
    %423 = vmatprep.subr.mxu0 0.0
    %424 = vmatpush1.msra.mxu0 0.0
    %425 = vmatprep.subr.mxu0 0.0
    %426 = vmatpush1.msra.mxu0 0.0
    %427 = vmatprep.subr.mxu0 0.0
    %428 = vmatpush1.msra.mxu0 0.0
    %429 = vmatprep.mubr.f32.mxu0 0.0
    %430 = vmatmul.mubr.f32.gmra.mrb[0].mxu0 %v363
    %v431 = vpop.f32.mrb[0].mxu0
    %v432 = vadd.f32 %v361, %v431
    %v433 = vpop.f32.mrb[0].mxu0
    %434 = vdwg.mxu0
    %v435 = vsel %vm39, %v432, 0.0
    %436 = vadd.xlane.f32.xlu0 %v435
    %v437 = vpop.xlane.xlu0 %436
    %v438 = vmul.f32 %v437, %v116
    %v439 = vsub.f32 %v432, %v438
    %v440 = vmul.f32 %v439, %v439
    %v441 = vsel %vm39, %v440, 0.0
    %442 = vadd.xlane.f32.xlu0 %v441
    %v443 = vpop.xlane.xlu0 %442
    %v444 = vmul.f32 %v443, %v116
    %v445 = vadd.f32 %v444, 1e-05
    %v446 = vrsqrt.pop %v445
    %v447 = vmul.f32 %v439, %v446
    %v448 = vlaneseq
    %v449 = vshrl.u32 %v448, 7
    %v450 = vsub.s32 1, %v449
    %v451 = vrot.slane %v357, %v450
    %v452 = vmul.f32 %v447, %v451
    %v453 = vlaneseq
    %v454 = vshrl.u32 %v453, 7
    %v455 = vsub.s32 2, %v454
    %v456 = vrot.slane %v357, %v455
    %v457 = vadd.f32 %v452, %v456
    %s458 = scalar_lea.vmem [#allocation2], 128
    %v459 = vld [vmem:[%s458] sm:$0xff]
    %v460 = vld [vmem:[%s458 + $0x8] sm:$0xff]
    %v461 = vld [vmem:[%s458 + $0x10] sm:$0xff]
    %v462 = vld [vmem:[%s458 + $0x18] sm:$0xff]
    %s463 = scalar_lea.vmem %s2, 16
    %v464 = vld [vmem:[%s463] sm:$0x7]
    %v465 = vlaneseq
    %v466 = vshrl.u32 %v465, 7
    %v467 = vsub.s32 0, %v466
    %v468 = vrot.slane %v464, %v467
    %v470 = vsel %vm39, %v457, 0
    %472 = vmatprep.subr.mxu0 0.0
    %473 = vmatpush1.msra.mxu0 %v459
    %474 = vmatprep.subr.mxu0 0.0
    %475 = vmatpush1.msra.mxu0 %v460
    %476 = vmatprep.subr.mxu0 0.0
    %477 = vmatpush1.msra.mxu0 %v461
    %478 = vmatprep.subr.mxu0 0.0
    %479 = vmatpush1.msra.mxu0 %v462
    %480 = vmatprep.subr.mxu0 0.0
    %481 = vmatpush1.msra.mxu0 0.0
    %482 = vmatprep.subr.mxu0 0.0
    %483 = vmatpush1.msra.mxu0 0.0
    %484 = vmatprep.subr.mxu0 0.0
    %485 = vmatpush1.msra.mxu0 0.0
    %486 = vmatprep.subr.mxu0 0.0
    %487 = vmatpush1.msra.mxu0 0.0
    %488 = vmatprep.subr.mxu0 0.0
    %489 = vmatpush1.msra.mxu0 0.0
    %490 = vmatprep.subr.mxu0 0.0
    %491 = vmatpush1.msra.mxu0 0.0
    %492 = vmatprep.subr.mxu0 0.0
    %493 = vmatpush1.msra.mxu0 0.0
    %494 = vmatprep.subr.mxu0 0.0
    %495 = vmatpush1.msra.mxu0 0.0
    %496 = vmatprep.subr.mxu0 0.0
    %497 = vmatpush1.msra.mxu0 0.0
    %498 = vmatprep.subr.mxu0 0.0
    %499 = vmatpush1.msra.mxu0 0.0
    %500 = vmatprep.subr.mxu0 0.0
    %501 = vmatpush1.msra.mxu0 0.0
    %502 = vmatprep.subr.mxu0 0.0
    %503 = vmatpush1.msra.mxu0 0.0
    %504 = vmatprep.subr.mxu0 0.0
    %505 = vmatpush1.msra.mxu0 0.0
    %506 = vmatprep.subr.mxu0 0.0
    %507 = vmatpush1.msra.mxu0 0.0
    %508 = vmatprep.subr.mxu0 0.0
    %509 = vmatpush1.msra.mxu0 0.0
    %510 = vmatprep.subr.mxu0 0.0
    %511 = vmatpush1.msra.mxu0 0.0
    %512 = vmatprep.subr.mxu0 0.0
    %513 = vmatpush1.msra.mxu0 0.0
    %514 = vmatprep.subr.mxu0 0.0
    %515 = vmatpush1.msra.mxu0 0.0
    %516 = vmatprep.subr.mxu0 0.0
    %517 = vmatpush1.msra.mxu0 0.0
    %518 = vmatprep.subr.mxu0 0.0
    %519 = vmatpush1.msra.mxu0 0.0
    %520 = vmatprep.subr.mxu0 0.0
    %521 = vmatpush1.msra.mxu0 0.0
    %522 = vmatprep.subr.mxu0 0.0
    %523 = vmatpush1.msra.mxu0 0.0
    %524 = vmatprep.subr.mxu0 0.0
    %525 = vmatpush1.msra.mxu0 0.0
    %526 = vmatprep.subr.mxu0 0.0
    %527 = vmatpush1.msra.mxu0 0.0
    %528 = vmatprep.subr.mxu0 0.0
    %529 = vmatpush1.msra.mxu0 0.0
    %530 = vmatprep.subr.mxu0 0.0
    %531 = vmatpush1.msra.mxu0 0.0
    %532 = vmatprep.subr.mxu0 0.0
    %533 = vmatpush1.msra.mxu0 0.0
    %534 = vmatprep.subr.mxu0 0.0
    %535 = vmatpush1.msra.mxu0 0.0
    %536 = vmatprep.mubr.f32.mxu0 0.0
    %537 = vmatmul.mubr.f32.gmra.mrb[0].mxu0 %v470
    %v538 = vpop.f32.mrb[0].mxu0
    %v539 = vadd.f32 %v468, %v538
    %v540 = vpop.f32.mrb[0].mxu0
    %541 = vdwg.mxu0
    %v542 = vsel %vm39, %v539, 0.0
    %543 = vadd.xlane.f32.xlu0 %v542
    %v544 = vpop.xlane.xlu0 %543
    %v545 = vmul.f32 %v544, %v116
    %v546 = vsub.f32 %v539, %v545
    %v547 = vmul.f32 %v546, %v546
    %v548 = vsel %vm39, %v547, 0.0
    %549 = vadd.xlane.f32.xlu0 %v548
    %v550 = vpop.xlane.xlu0 %549
    %v551 = vmul.f32 %v550, %v116
    %v552 = vadd.f32 %v551, 1e-05
    %v553 = vrsqrt.pop %v552
    %v554 = vmul.f32 %v546, %v553
    %v555 = vlaneseq
    %v556 = vshrl.u32 %v555, 7
    %v557 = vsub.s32 1, %v556
    %v558 = vrot.slane %v464, %v557
    %v559 = vmul.f32 %v554, %v558
    %v560 = vlaneseq
    %v561 = vshrl.u32 %v560, 7
    %v562 = vsub.s32 2, %v561
    %v563 = vrot.slane %v464, %v562
    %v564 = vadd.f32 %v559, %v563
    %s565 = scalar_lea.vmem [#allocation2], 160
    %v566 = vld [vmem:[%s565] sm:$0xff]
    %v567 = vld [vmem:[%s565 + $0x8] sm:$0xff]
    %v568 = vld [vmem:[%s565 + $0x10] sm:$0xff]
    %v569 = vld [vmem:[%s565 + $0x18] sm:$0xff]
    %s570 = scalar_lea.vmem %s2, 20
    %v571 = vld [vmem:[%s570] sm:$0x7]
    %v572 = vlaneseq
    %v573 = vshrl.u32 %v572, 7
    %v574 = vsub.s32 0, %v573
    %v575 = vrot.slane %v571, %v574
    %v577 = vsel %vm39, %v564, 0
    %579 = vmatprep.subr.mxu0 0.0
    %580 = vmatpush1.msra.mxu0 %v566
    %581 = vmatprep.subr.mxu0 0.0
    %582 = vmatpush1.msra.mxu0 %v567
    %583 = vmatprep.subr.mxu0 0.0
    %584 = vmatpush1.msra.mxu0 %v568
    %585 = vmatprep.subr.mxu0 0.0
    %586 = vmatpush1.msra.mxu0 %v569
    %587 = vmatprep.subr.mxu0 0.0
    %588 = vmatpush1.msra.mxu0 0.0
    %589 = vmatprep.subr.mxu0 0.0
    %590 = vmatpush1.msra.mxu0 0.0
    %591 = vmatprep.subr.mxu0 0.0
    %592 = vmatpush1.msra.mxu0 0.0
    %593 = vmatprep.subr.mxu0 0.0
    %594 = vmatpush1.msra.mxu0 0.0
    %595 = vmatprep.subr.mxu0 0.0
    %596 = vmatpush1.msra.mxu0 0.0
    %597 = vmatprep.subr.mxu0 0.0
    %598 = vmatpush1.msra.mxu0 0.0
    %599 = vmatprep.subr.mxu0 0.0
    %600 = vmatpush1.msra.mxu0 0.0
    %601 = vmatprep.subr.mxu0 0.0
    %602 = vmatpush1.msra.mxu0 0.0
    %603 = vmatprep.subr.mxu0 0.0
    %604 = vmatpush1.msra.mxu0 0.0
    %605 = vmatprep.subr.mxu0 0.0
    %606 = vmatpush1.msra.mxu0 0.0
    %607 = vmatprep.subr.mxu0 0.0
    %608 = vmatpush1.msra.mxu0 0.0
    %609 = vmatprep.subr.mxu0 0.0
    %610 = vmatpush1.msra.mxu0 0.0
    %611 = vmatprep.subr.mxu0 0.0
    %612 = vmatpush1.msra.mxu0 0.0
    %613 = vmatprep.subr.mxu0 0.0
    %614 = vmatpush1.msra.mxu0 0.0
    %615 = vmatprep.subr.mxu0 0.0
    %616 = vmatpush1.msra.mxu0 0.0
    %617 = vmatprep.subr.mxu0 0.0
    %618 = vmatpush1.msra.mxu0 0.0
    %619 = vmatprep.subr.mxu0 0.0
    %620 = vmatpush1.msra.mxu0 0.0
    %621 = vmatprep.subr.mxu0 0.0
    %622 = vmatpush1.msra.mxu0 0.0
    %623 = vmatprep.subr.mxu0 0.0
    %624 = vmatpush1.msra.mxu0 0.0
    %625 = vmatprep.subr.mxu0 0.0
    %626 = vmatpush1.msra.mxu0 0.0
    %627 = vmatprep.subr.mxu0 0.0
    %628 = vmatpush1.msra.mxu0 0.0
    %629 = vmatprep.subr.mxu0 0.0
    %630 = vmatpush1.msra.mxu0 0.0
    %631 = vmatprep.subr.mxu0 0.0
    %632 = vmatpush1.msra.mxu0 0.0
    %633 = vmatprep.subr.mxu0 0.0
    %634 = vmatpush1.msra.mxu0 0.0
    %635 = vmatprep.subr.mxu0 0.0
    %636 = vmatpush1.msra.mxu0 0.0
    %637 = vmatprep.subr.mxu0 0.0
    %638 = vmatpush1.msra.mxu0 0.0
    %639 = vmatprep.subr.mxu0 0.0
    %640 = vmatpush1.msra.mxu0 0.0
    %641 = vmatprep.subr.mxu0 0.0
    %642 = vmatpush1.msra.mxu0 0.0
    %643 = vmatprep.mubr.f32.mxu0 0.0
    %644 = vmatmul.mubr.f32.gmra.mrb[0].mxu0 %v577
    %v645 = vpop.f32.mrb[0].mxu0
    %v646 = vadd.f32 %v575, %v645
    %v647 = vpop.f32.mrb[0].mxu0
    %648 = vdwg.mxu0
    %v649 = vsel %vm39, %v646, 0.0
    %650 = vadd.xlane.f32.xlu0 %v649
    %v651 = vpop.xlane.xlu0 %650
    %v652 = vmul.f32 %v651, %v116
    %v653 = vsub.f32 %v646, %v652
    %v654 = vmul.f32 %v653, %v653
    %v655 = vsel %vm39, %v654, 0.0
    %656 = vadd.xlane.f32.xlu0 %v655
    %v657 = vpop.xlane.xlu0 %656
    %v658 = vmul.f32 %v657, %v116
    %v659 = vadd.f32 %v658, 1e-05
    %v660 = vrsqrt.pop %v659
    %v661 = vmul.f32 %v653, %v660
    %v662 = vlaneseq
    %v663 = vshrl.u32 %v662, 7
    %v664 = vsub.s32 1, %v663
    %v665 = vrot.slane %v571, %v664
    %v666 = vmul.f32 %v661, %v665
    %v667 = vlaneseq
    %v668 = vshrl.u32 %v667, 7
    %v669 = vsub.s32 2, %v668
    %v670 = vrot.slane %v571, %v669
    %v671 = vadd.f32 %v666, %v670
    %s672 = scalar_lea.vmem [#allocation2], 192
    %v673 = vld [vmem:[%s672] sm:$0xff]
    %v674 = vld [vmem:[%s672 + $0x8] sm:$0xff]
    %v675 = vld [vmem:[%s672 + $0x10] sm:$0xff]
    %v676 = vld [vmem:[%s672 + $0x18] sm:$0xff]
    %s677 = scalar_lea.vmem %s2, 24
    %v678 = vld [vmem:[%s677] sm:$0x7]
    %v679 = vlaneseq
    %v680 = vshrl.u32 %v679, 7
    %v681 = vsub.s32 0, %v680
    %v682 = vrot.slane %v678, %v681
    %v684 = vsel %vm39, %v671, 0
    %686 = vmatprep.subr.mxu0 0.0
    %687 = vmatpush1.msra.mxu0 %v673
    %688 = vmatprep.subr.mxu0 0.0
    %689 = vmatpush1.msra.mxu0 %v674
    %690 = vmatprep.subr.mxu0 0.0
    %691 = vmatpush1.msra.mxu0 %v675
    %692 = vmatprep.subr.mxu0 0.0
    %693 = vmatpush1.msra.mxu0 %v676
    %694 = vmatprep.subr.mxu0 0.0
    %695 = vmatpush1.msra.mxu0 0.0
    %696 = vmatprep.subr.mxu0 0.0
    %697 = vmatpush1.msra.mxu0 0.0
    %698 = vmatprep.subr.mxu0 0.0
    %699 = vmatpush1.msra.mxu0 0.0
    %700 = vmatprep.subr.mxu0 0.0
    %701 = vmatpush1.msra.mxu0 0.0
    %702 = vmatprep.subr.mxu0 0.0
    %703 = vmatpush1.msra.mxu0 0.0
    %704 = vmatprep.subr.mxu0 0.0
    %705 = vmatpush1.msra.mxu0 0.0
    %706 = vmatprep.subr.mxu0 0.0
    %707 = vmatpush1.msra.mxu0 0.0
    %708 = vmatprep.subr.mxu0 0.0
    %709 = vmatpush1.msra.mxu0 0.0
    %710 = vmatprep.subr.mxu0 0.0
    %711 = vmatpush1.msra.mxu0 0.0
    %712 = vmatprep.subr.mxu0 0.0
    %713 = vmatpush1.msra.mxu0 0.0
    %714 = vmatprep.subr.mxu0 0.0
    %715 = vmatpush1.msra.mxu0 0.0
    %716 = vmatprep.subr.mxu0 0.0
    %717 = vmatpush1.msra.mxu0 0.0
    %718 = vmatprep.subr.mxu0 0.0
    %719 = vmatpush1.msra.mxu0 0.0
    %720 = vmatprep.subr.mxu0 0.0
    %721 = vmatpush1.msra.mxu0 0.0
    %722 = vmatprep.subr.mxu0 0.0
    %723 = vmatpush1.msra.mxu0 0.0
    %724 = vmatprep.subr.mxu0 0.0
    %725 = vmatpush1.msra.mxu0 0.0
    %726 = vmatprep.subr.mxu0 0.0
    %727 = vmatpush1.msra.mxu0 0.0
    %728 = vmatprep.subr.mxu0 0.0
    %729 = vmatpush1.msra.mxu0 0.0
    %730 = vmatprep.subr.mxu0 0.0
    %731 = vmatpush1.msra.mxu0 0.0
    %732 = vmatprep.subr.mxu0 0.0
    %733 = vmatpush1.msra.mxu0 0.0
    %734 = vmatprep.subr.mxu0 0.0
    %735 = vmatpush1.msra.mxu0 0.0
    %736 = vmatprep.subr.mxu0 0.0
    %737 = vmatpush1.msra.mxu0 0.0
    %738 = vmatprep.subr.mxu0 0.0
    %739 = vmatpush1.msra.mxu0 0.0
    %740 = vmatprep.subr.mxu0 0.0
    %741 = vmatpush1.msra.mxu0 0.0
    %742 = vmatprep.subr.mxu0 0.0
    %743 = vmatpush1.msra.mxu0 0.0
    %744 = vmatprep.subr.mxu0 0.0
    %745 = vmatpush1.msra.mxu0 0.0
    %746 = vmatprep.subr.mxu0 0.0
    %747 = vmatpush1.msra.mxu0 0.0
    %748 = vmatprep.subr.mxu0 0.0
    %749 = vmatpush1.msra.mxu0 0.0
    %750 = vmatprep.mubr.f32.mxu0 0.0
    %751 = vmatmul.mubr.f32.gmra.mrb[0].mxu0 %v684
    %v752 = vpop.f32.mrb[0].mxu0
    %v753 = vadd.f32 %v682, %v752
    %v754 = vpop.f32.mrb[0].mxu0
    %755 = vdwg.mxu0
    %v756 = vsel %vm39, %v753, 0.0
    %757 = vadd.xlane.f32.xlu0 %v756
    %v758 = vpop.xlane.xlu0 %757
    %v759 = vmul.f32 %v758, %v116
    %v760 = vsub.f32 %v753, %v759
    %v761 = vmul.f32 %v760, %v760
    %v762 = vsel %vm39, %v761, 0.0
    %763 = vadd.xlane.f32.xlu0 %v762
    %v764 = vpop.xlane.xlu0 %763
    %v765 = vmul.f32 %v764, %v116
    %v766 = vadd.f32 %v765, 1e-05
    %v767 = vrsqrt.pop %v766
    %v768 = vmul.f32 %v760, %v767
    %v769 = vlaneseq
    %v770 = vshrl.u32 %v769, 7
    %v771 = vsub.s32 1, %v770
    %v772 = vrot.slane %v678, %v771
    %v773 = vmul.f32 %v768, %v772
    %v774 = vlaneseq
    %v775 = vshrl.u32 %v774, 7
    %v776 = vsub.s32 2, %v775
    %v777 = vrot.slane %v678, %v776
    %v778 = vadd.f32 %v773, %v777
    %s779 = scalar_lea.vmem [#allocation2], 224
    %v780 = vld [vmem:[%s779] sm:$0xff]
    %v781 = vld [vmem:[%s779 + $0x8] sm:$0xff]
    %v782 = vld [vmem:[%s779 + $0x10] sm:$0xff]
    %v783 = vld [vmem:[%s779 + $0x18] sm:$0xff]
    %s784 = scalar_lea.vmem %s2, 28
    %v785 = vld [vmem:[%s784] sm:$0x7]
    %v786 = vlaneseq
    %v787 = vshrl.u32 %v786, 7
    %v788 = vsub.s32 0, %v787
    %v789 = vrot.slane %v785, %v788
    %v791 = vsel %vm39, %v778, 0
    %793 = vmatprep.subr.mxu0 0.0
    %794 = vmatpush1.msra.mxu0 %v780
    %795 = vmatprep.subr.mxu0 0.0
    %796 = vmatpush1.msra.mxu0 %v781
    %797 = vmatprep.subr.mxu0 0.0
    %798 = vmatpush1.msra.mxu0 %v782
    %799 = vmatprep.subr.mxu0 0.0
    %800 = vmatpush1.msra.mxu0 %v783
    %801 = vmatprep.subr.mxu0 0.0
    %802 = vmatpush1.msra.mxu0 0.0
    %803 = vmatprep.subr.mxu0 0.0
    %804 = vmatpush1.msra.mxu0 0.0
    %805 = vmatprep.subr.mxu0 0.0
    %806 = vmatpush1.msra.mxu0 0.0
    %807 = vmatprep.subr.mxu0 0.0
    %808 = vmatpush1.msra.mxu0 0.0
    %809 = vmatprep.subr.mxu0 0.0
    %810 = vmatpush1.msra.mxu0 0.0
    %811 = vmatprep.subr.mxu0 0.0
    %812 = vmatpush1.msra.mxu0 0.0
    %813 = vmatprep.subr.mxu0 0.0
    %814 = vmatpush1.msra.mxu0 0.0
    %815 = vmatprep.subr.mxu0 0.0
    %816 = vmatpush1.msra.mxu0 0.0
    %817 = vmatprep.subr.mxu0 0.0
    %818 = vmatpush1.msra.mxu0 0.0
    %819 = vmatprep.subr.mxu0 0.0
    %820 = vmatpush1.msra.mxu0 0.0
    %821 = vmatprep.subr.mxu0 0.0
    %822 = vmatpush1.msra.mxu0 0.0
    %823 = vmatprep.subr.mxu0 0.0
    %824 = vmatpush1.msra.mxu0 0.0
    %825 = vmatprep.subr.mxu0 0.0
    %826 = vmatpush1.msra.mxu0 0.0
    %827 = vmatprep.subr.mxu0 0.0
    %828 = vmatpush1.msra.mxu0 0.0
    %829 = vmatprep.subr.mxu0 0.0
    %830 = vmatpush1.msra.mxu0 0.0
    %831 = vmatprep.subr.mxu0 0.0
    %832 = vmatpush1.msra.mxu0 0.0
    %833 = vmatprep.subr.mxu0 0.0
    %834 = vmatpush1.msra.mxu0 0.0
    %835 = vmatprep.subr.mxu0 0.0
    %836 = vmatpush1.msra.mxu0 0.0
    %837 = vmatprep.subr.mxu0 0.0
    %838 = vmatpush1.msra.mxu0 0.0
    %839 = vmatprep.subr.mxu0 0.0
    %840 = vmatpush1.msra.mxu0 0.0
    %841 = vmatprep.subr.mxu0 0.0
    %842 = vmatpush1.msra.mxu0 0.0
    %843 = vmatprep.subr.mxu0 0.0
    %844 = vmatpush1.msra.mxu0 0.0
    %845 = vmatprep.subr.mxu0 0.0
    %846 = vmatpush1.msra.mxu0 0.0
    %847 = vmatprep.subr.mxu0 0.0
    %848 = vmatpush1.msra.mxu0 0.0
    %849 = vmatprep.subr.mxu0 0.0
    %850 = vmatpush1.msra.mxu0 0.0
    %851 = vmatprep.subr.mxu0 0.0
    %852 = vmatpush1.msra.mxu0 0.0
    %853 = vmatprep.subr.mxu0 0.0
    %854 = vmatpush1.msra.mxu0 0.0
    %855 = vmatprep.subr.mxu0 0.0
    %856 = vmatpush1.msra.mxu0 0.0
    %857 = vmatprep.mubr.f32.mxu0 0.0
    %858 = vmatmul.mubr.f32.gmra.mrb[0].mxu0 %v791
    %v859 = vpop.f32.mrb[0].mxu0
    %v860 = vadd.f32 %v789, %v859
    %v861 = vpop.f32.mrb[0].mxu0
    %862 = vdwg.mxu0
    %v863 = vsel %vm39, %v860, 0.0
    %864 = vadd.xlane.f32.xlu0 %v863
    %v865 = vpop.xlane.xlu0 %864
    %v866 = vmul.f32 %v865, %v116
    %v867 = vsub.f32 %v860, %v866
    %v868 = vmul.f32 %v867, %v867
    %v869 = vsel %vm39, %v868, 0.0
    %870 = vadd.xlane.f32.xlu0 %v869
    %v871 = vpop.xlane.xlu0 %870
    %v872 = vmul.f32 %v871, %v116
    %v873 = vadd.f32 %v872, 1e-05
    %v874 = vrsqrt.pop %v873
    %v875 = vmul.f32 %v867, %v874
    %v876 = vlaneseq
    %v877 = vshrl.u32 %v876, 7
    %v878 = vsub.s32 1, %v877
    %v879 = vrot.slane %v785, %v878
    %v880 = vmul.f32 %v875, %v879
    %v881 = vlaneseq
    %v882 = vshrl.u32 %v881, 7
    %v883 = vsub.s32 2, %v882
    %v884 = vrot.slane %v785, %v883
    %v885 = vadd.f32 %v880, %v884
    %886 = vst.msk [vmem:[#allocation5] sm:$0xff] %vm39, %v885
    // Predicated region
    $region18: #{mapping_network.1} parent=1 // pred_check
      _
    $region19: #{mapping_network.1} parent=1 // pred_check_branch
      %888 = sbr.rel (0) target = $region21
    $region20: #{mapping_network.1} parent=1 // pred_region
      %s890 = ssub.s32 128, 128
      %891 = vsyncadd [#allocation4], %s890
      %s893 = sshll.u32 [#allocation5], 4
      %s894 = int_to_ptr.vmem [resolvable:$true] %s893
      %896 = dma.vmem_to_hbm [thread:$0]  %s894, 128, %s3, [#allocation4]
    $region21: #{mapping_network.1} parent=1 // pred_fallthru
      _
    // Predicated region
    $region22: #{mapping_network.1} parent=1 // pred_check
      _
    $region23: #{mapping_network.1} parent=1 // pred_check_branch
      %898 = sbr.rel (0) target = $region25
    $region24: #{mapping_network.1} parent=1 // pred_region
      %899 = dma.done [#allocation4], 128
    $region25: #{mapping_network.1} parent=1 // pred_fallthru
      _
    %900 = vsyncpa [#allocation3], 1
    %901 = vsyncpa [#allocation4], 1

</llo_original>
